<compile_context>
chip_gen: v7x
topology: tpu7x:2x2x1
jax: 0.10.0
libtpu: 0.0.40
codegen_flags: <defaults>
</compile_context>

<pallas_src>
import jax
import jax.numpy as jnp
from jax.experimental import pallas as pl
from jax.experimental.pallas import tpu as pltpu

K = 7      # Conv1d kernel size
PAD = 3    # Conv1d padding


def basic_block_kernel(x_ref, w1_ref, w2_ref, fc1_ref, fc2_ref, o_ref):
    """x_ref  : (BB, L, Cin)    bf16 input block
       w1_ref : (K*Cin, Cout)   bf16 conv1 weight, im2col (tap-major) layout
       w2_ref : (K*Cout, Cout)  bf16 conv2 weight, im2col layout
       fc1_ref: (Cr, Cout)      f32 SE squeeze weight (torch Linear layout)
       fc2_ref: (Cr, Cout)      f32 SE excite weight (transposed torch Linear)
       o_ref  : (BB, L, Cout)   output block
    """
    BB, L, Cin = x_ref.shape
    Cout = o_ref.shape[-1]
    Cr = fc1_ref.shape[0]

    x = x_ref[...].astype(jnp.float32)                       # (BB, L, Cin)

    # ---- conv1 as one im2col matmul --------------------------------------
    zx = jnp.zeros((BB, PAD, Cin), jnp.float32)
    xp = jnp.concatenate([zx, x, zx], axis=1)                # (BB, L+6, Cin)
    xcat = jnp.concatenate([xp[:, k:k + L, :] for k in range(K)], axis=-1)
    h = jnp.dot(xcat.reshape(BB * L, K * Cin).astype(jnp.bfloat16),
                w1_ref[...], preferred_element_type=jnp.float32)   # (BB*L, Cout)
    h = jnp.maximum(h, 0.0)                                  # bn1=Identity; ReLU
    # TODO(synk): nn.Dropout(0.2) is stochastic only in train mode; eval = identity.

    # ---- conv2 (halo padded in registers; no VMEM scratch round-trip) -----
    hb = h.reshape(BB, L, Cout)
    zh = jnp.zeros((BB, PAD, Cout), jnp.float32)
    hp = jnp.concatenate([zh, hb, zh], axis=1)               # (BB, L+6, Cout)
    hcat = jnp.concatenate([hp[:, k:k + L, :] for k in range(K)], axis=-1)
    h2 = jnp.dot(hcat.reshape(BB * L, K * Cout).astype(jnp.bfloat16),
                 w2_ref[...], preferred_element_type=jnp.float32)  # (BB*L, Cout)
    h2 = h2.reshape(BB, L, Cout)                             # bn2=Identity

    # ---- Squeeze-and-Excitation on VPU/XLU (keeps the MXU free) -----------
    y = jnp.mean(h2, axis=1)                                 # (BB, Cout)
    fc1 = fc1_ref[...]
    fc2 = fc2_ref[...]
    s = jnp.zeros((BB, Cout), jnp.float32)
    for r in range(Cr):                                      # Cr = Cout // 16, tiny
        zr = jnp.sum(y * fc1[r:r + 1, :], axis=-1, keepdims=True)  # (BB, 1)
        zr = jnp.maximum(zr, 0.0)
        s = s + zr * fc2[r:r + 1, :]                         # (BB, Cout)
    s = jax.nn.sigmoid(s)                                    # EUP

    # ---- channel scale + residual + final ReLU ----------------------------
    out = jnp.maximum(h2 * s.reshape(BB, 1, Cout) + x, 0.0)
    o_ref[...] = out.astype(o_ref.dtype)


def basic_block(x_blc, w1_kio, w2_kio, fc1_rc, fc2_rc, batch_block=None):
    """x_blc : (B, L, C) float32 input in length-major layout.
       w1_kio, w2_kio : (K, C, C) conv weights, tap-major (w[k,i,o] == torch_w[o,i,k]).
       fc1_rc : (C//16, C) SE squeeze weight (== torch fc1 weight).
       fc2_rc : (C//16, C) SE excite weight (== torch fc2 weight, transposed).
    """
    B, L, Cin = x_blc.shape
    Cout = w1_kio.shape[-1]
    assert Cin == Cout, "stride=1 / downsample=None requires inplanes == planes"
    assert w1_kio.shape == (K, Cin, Cout) and w2_kio.shape == (K, Cout, Cout)

    if batch_block is None:
        # Keep >= 2 grid steps when possible so both v7x TensorCores get work;
        # the extra ~0.35us step on single-TC v5e/v6e is negligible here.
        batch_block = B // 2 if (B % 2 == 0 and B >= 2) else B
    assert B % batch_block == 0
    nb = B // batch_block
    Cr = fc1_rc.shape[0]

    # bf16 MXU operands + halved input/weight DMA bytes; f32 accumulation in-kernel.
    x_bf = x_blc.astype(jnp.bfloat16)
    w1c = w1_kio.reshape(K * Cin, Cout).astype(jnp.bfloat16)   # im2col weight layout
    w2c = w2_kio.reshape(K * Cout, Cout).astype(jnp.bfloat16)
    fc1 = fc1_rc.astype(jnp.float32)
    fc2 = fc2_rc.astype(jnp.float32)

    grid_spec = pltpu.PrefetchScalarGridSpec(
        num_scalar_prefetch=0,
        grid=(nb,),
        in_specs=[
            pl.BlockSpec((batch_block, L, Cin), lambda b: (b, 0, 0)),
            pl.BlockSpec((K * Cin, Cout), lambda b: (0, 0)),
            pl.BlockSpec((K * Cout, Cout), lambda b: (0, 0)),
            pl.BlockSpec((Cr, Cout), lambda b: (0, 0)),
            pl.BlockSpec((Cr, Cout), lambda b: (0, 0)),
        ],
        out_specs=pl.BlockSpec((batch_block, L, Cout), lambda b: (b, 0, 0)),
    )

    # NOTE: Cout=32 (<128) keeps output stores lane-masked; acceptable at this
    # size and it fixes itself for the wider layers (C >= 128) of the network.
    return pl.pallas_call(
        basic_block_kernel,
        out_shape=jax.ShapeDtypeStruct((B, L, Cout), x_blc.dtype),
        grid_spec=grid_spec,
        compiler_params=pltpu.CompilerParams(
            dimension_semantics=("parallel",)),
    )(x_bf, w1c, w2c, fc1, fc2)


def basic_block_ref(x_blc, w1_kio, w2_kio, fc1_rc, fc2_rc):
    """Pure-JAX f32 reference with the PyTorch module's (eval-mode) semantics."""
    B, L, C = x_blc.shape
    xp = jnp.pad(x_blc, ((0, 0), (PAD, PAD), (0, 0)))
    h = sum(jnp.einsum('blc,cd->bld', xp[:, k:k + L], w1_kio[k]) for k in range(K))
    h = jax.nn.relu(h)
    hp = jnp.pad(h, ((0, 0), (PAD, PAD), (0, 0)))
    h2 = sum(jnp.einsum('blc,cd->bld', hp[:, k:k + L], w2_kio[k]) for k in range(K))
    y = h2.mean(axis=1)                              # (B, C)
    z = jax.nn.relu(y @ fc1_rc.T)                    # (B, C//16)
    s = jax.nn.sigmoid(z @ fc2_rc)                   # (B, C)
    return jax.nn.relu(h2 * s[:, None, :] + x_blc)


if __name__ == "__main__":
    # inplanes = planes = 32 so the stride=1 / downsample=None residual is valid;
    # SE reduction 16 -> hidden 2.
    B, C, L = 2, 32, 64
    RED = 16

    key = jax.random.PRNGKey(0)
    kx, k1, k2, k3, k4 = jax.random.split(key, 5)

    # Input in PyTorch NCL layout, moved to the kernel's (B, L, C) layout.
    x_ncl = jax.random.normal(kx, (B, C, L), dtype=jnp.float32)
    x_blc = jnp.transpose(x_ncl, (0, 2, 1))

    # Conv1d torch layout is (out, in, k); stored tap-major (k, in, out).
    w1 = 0.1 * jax.random.normal(k1, (K, C, C), dtype=jnp.float32)
    w2 = 0.1 * jax.random.normal(k2, (K, C, C), dtype=jnp.float32)
    # SE weights: fc1 as torch (out, in) = (C//16, C); fc2 stored transposed (C//16, C).
    fc1 = 0.2 * jax.random.normal(k3, (C // RED, C), dtype=jnp.float32)
    fc2 = 0.2 * jax.random.normal(k4, (C // RED, C), dtype=jnp.float32)

    out = basic_block(x_blc, w1, w2, fc1, fc2)
    out = jax.block_until_ready(out)

    ref = basic_block_ref(x_blc, w1, w2, fc1, fc2)
    # Tolerance loosened from 1e-4: matmul operands are bf16 (f32 accumulation).
    if not jnp.allclose(out, ref, atol=5e-2, rtol=5e-2):
        raise AssertionError("Pallas kernel output does not match reference")

    print("KERNEL_OK")
</pallas_src>

<mosaic_0001>
module attributes {stable_mosaic.version = 11 : i64} {
  func.func @basic_block_kernel(%arg0: i32, %arg1: memref<1x64x32xbf16, #tpu.memory_space<vmem>>, %arg2: memref<224x32xbf16, #tpu.memory_space<vmem>>, %arg3: memref<224x32xbf16, #tpu.memory_space<vmem>>, %arg4: memref<2x32xf32, #tpu.memory_space<vmem>>, %arg5: memref<2x32xf32, #tpu.memory_space<vmem>>, %arg6: memref<1x64x32xf32, #tpu.memory_space<vmem>>) attributes {dimension_semantics = [#tpu.dimension_semantics<parallel>], iteration_bounds = array<i64: 2>, scalar_prefetch = 0 : i64, scratch_operands = 0 : i64, tpu.core_type = #tpu.core_type<tc>, window_params = [{transform_indices = @transform_0, window_bounds = array<i64: 1, 64, 32>}, {pipeline_mode = #tpu.pipeline_mode<synchronous>, transform_indices = @transform_1, window_bounds = array<i64: 224, 32>}, {pipeline_mode = #tpu.pipeline_mode<synchronous>, transform_indices = @transform_2, window_bounds = array<i64: 224, 32>}, {pipeline_mode = #tpu.pipeline_mode<synchronous>, transform_indices = @transform_3, window_bounds = array<i64: 2, 32>}, {pipeline_mode = #tpu.pipeline_mode<synchronous>, transform_indices = @transform_4, window_bounds = array<i64: 2, 32>}, {transform_indices = @transform_5, window_bounds = array<i64: 1, 64, 32>}]} {
    %c0 = arith.constant 0 : index
    %c0_0 = arith.constant 0 : index
    %c0_1 = arith.constant 0 : index
    %0 = vector.load %arg1[%c0, %c0_0, %c0_1] : memref<1x64x32xbf16, #tpu.memory_space<vmem>>, vector<1x64x32xbf16>
    %1 = arith.extf %0 : vector<1x64x32xbf16> to vector<1x64x32xf32>
    %cst = arith.constant 0.000000e+00 : f32
    %2 = vector.broadcast %cst : f32 to vector<1x3x32xf32>
    %3 = tpu.concatenate %2, %1, %2 in 1 : vector<1x3x32xf32>, vector<1x64x32xf32>, vector<1x3x32xf32> -> vector<1x70x32xf32>
    %4 = vector.extract_strided_slice %3 {offsets = [0, 0, 0], sizes = [1, 64, 32], strides = [1, 1, 1]} : vector<1x70x32xf32> to vector<1x64x32xf32>
    %5 = vector.extract_strided_slice %3 {offsets = [0, 1, 0], sizes = [1, 64, 32], strides = [1, 1, 1]} : vector<1x70x32xf32> to vector<1x64x32xf32>
    %6 = vector.extract_strided_slice %3 {offsets = [0, 2, 0], sizes = [1, 64, 32], strides = [1, 1, 1]} : vector<1x70x32xf32> to vector<1x64x32xf32>
    %7 = vector.extract_strided_slice %3 {offsets = [0, 3, 0], sizes = [1, 64, 32], strides = [1, 1, 1]} : vector<1x70x32xf32> to vector<1x64x32xf32>
    %8 = vector.extract_strided_slice %3 {offsets = [0, 4, 0], sizes = [1, 64, 32], strides = [1, 1, 1]} : vector<1x70x32xf32> to vector<1x64x32xf32>
    %9 = vector.extract_strided_slice %3 {offsets = [0, 5, 0], sizes = [1, 64, 32], strides = [1, 1, 1]} : vector<1x70x32xf32> to vector<1x64x32xf32>
    %10 = vector.extract_strided_slice %3 {offsets = [0, 6, 0], sizes = [1, 64, 32], strides = [1, 1, 1]} : vector<1x70x32xf32> to vector<1x64x32xf32>
    %11 = tpu.concatenate %4, %5, %6, %7, %8, %9, %10 in 2 : vector<1x64x32xf32>, vector<1x64x32xf32>, vector<1x64x32xf32>, vector<1x64x32xf32>, vector<1x64x32xf32>, vector<1x64x32xf32>, vector<1x64x32xf32> -> vector<1x64x224xf32>
    %12 = vector.shape_cast %11 : vector<1x64x224xf32> to vector<64x224xf32>
    %13 = arith.truncf %12 : vector<64x224xf32> to vector<64x224xbf16>
    %c0_2 = arith.constant 0 : index
    %c0_3 = arith.constant 0 : index
    %14 = vector.load %arg2[%c0_2, %c0_3] : memref<224x32xbf16, #tpu.memory_space<vmem>>, vector<224x32xbf16>
    %cst_4 = arith.constant dense<0.000000e+00> : vector<64x32xf32>
    %15 = tpu.matmul %13, %14, %cst_4 {dimension_numbers = #tpu.dot_dimension_numbers<[1], [0], [0], [1], [0, 0, 1, 1], [], []>} : vector<64x224xbf16>, vector<224x32xbf16>, vector<64x32xf32> -> vector<64x32xf32>
    %cst_5 = arith.constant 0.000000e+00 : f32
    %16 = vector.broadcast %cst_5 : f32 to vector<64x32xf32>
    %17 = arith.maximumf %15, %16 : vector<64x32xf32>
    %18 = vector.shape_cast %17 : vector<64x32xf32> to vector<1x64x32xf32>
    %cst_6 = arith.constant 0.000000e+00 : f32
    %19 = vector.broadcast %cst_6 : f32 to vector<1x3x32xf32>
    %20 = tpu.concatenate %19, %18, %19 in 1 : vector<1x3x32xf32>, vector<1x64x32xf32>, vector<1x3x32xf32> -> vector<1x70x32xf32>
    %21 = vector.extract_strided_slice %20 {offsets = [0, 0, 0], sizes = [1, 64, 32], strides = [1, 1, 1]} : vector<1x70x32xf32> to vector<1x64x32xf32>
    %22 = vector.extract_strided_slice %20 {offsets = [0, 1, 0], sizes = [1, 64, 32], strides = [1, 1, 1]} : vector<1x70x32xf32> to vector<1x64x32xf32>
    %23 = vector.extract_strided_slice %20 {offsets = [0, 2, 0], sizes = [1, 64, 32], strides = [1, 1, 1]} : vector<1x70x32xf32> to vector<1x64x32xf32>
    %24 = vector.extract_strided_slice %20 {offsets = [0, 3, 0], sizes = [1, 64, 32], strides = [1, 1, 1]} : vector<1x70x32xf32> to vector<1x64x32xf32>
    %25 = vector.extract_strided_slice %20 {offsets = [0, 4, 0], sizes = [1, 64, 32], strides = [1, 1, 1]} : vector<1x70x32xf32> to vector<1x64x32xf32>
    %26 = vector.extract_strided_slice %20 {offsets = [0, 5, 0], sizes = [1, 64, 32], strides = [1, 1, 1]} : vector<1x70x32xf32> to vector<1x64x32xf32>
    %27 = vector.extract_strided_slice %20 {offsets = [0, 6, 0], sizes = [1, 64, 32], strides = [1, 1, 1]} : vector<1x70x32xf32> to vector<1x64x32xf32>
    %28 = tpu.concatenate %21, %22, %23, %24, %25, %26, %27 in 2 : vector<1x64x32xf32>, vector<1x64x32xf32>, vector<1x64x32xf32>, vector<1x64x32xf32>, vector<1x64x32xf32>, vector<1x64x32xf32>, vector<1x64x32xf32> -> vector<1x64x224xf32>
    %29 = vector.shape_cast %28 : vector<1x64x224xf32> to vector<64x224xf32>
    %30 = arith.truncf %29 : vector<64x224xf32> to vector<64x224xbf16>
    %c0_7 = arith.constant 0 : index
    %c0_8 = arith.constant 0 : index
    %31 = vector.load %arg3[%c0_7, %c0_8] : memref<224x32xbf16, #tpu.memory_space<vmem>>, vector<224x32xbf16>
    %cst_9 = arith.constant dense<0.000000e+00> : vector<64x32xf32>
    %32 = tpu.matmul %30, %31, %cst_9 {dimension_numbers = #tpu.dot_dimension_numbers<[1], [0], [0], [1], [0, 0, 1, 1], [], []>} : vector<64x224xbf16>, vector<224x32xbf16>, vector<64x32xf32> -> vector<64x32xf32>
    %33 = vector.shape_cast %32 : vector<64x32xf32> to vector<1x64x32xf32>
    %cst_10 = arith.constant dense<0.000000e+00> : vector<1x32xf32>
    %34 = vector.multi_reduction <add>, %33, %cst_10 [1] : vector<1x64x32xf32> to vector<1x32xf32>
    %cst_11 = arith.constant 6.400000e+01 : f32
    %35 = vector.broadcast %cst_11 : f32 to vector<1x32xf32>
    %36 = arith.divf %34, %35 : vector<1x32xf32>
    %c0_12 = arith.constant 0 : index
    %c0_13 = arith.constant 0 : index
    %37 = vector.load %arg4[%c0_12, %c0_13] : memref<2x32xf32, #tpu.memory_space<vmem>>, vector<2x32xf32>
    %c0_14 = arith.constant 0 : index
    %c0_15 = arith.constant 0 : index
    %38 = vector.load %arg5[%c0_14, %c0_15] : memref<2x32xf32, #tpu.memory_space<vmem>>, vector<2x32xf32>
    %cst_16 = arith.constant 0.000000e+00 : f32
    %39 = vector.broadcast %cst_16 : f32 to vector<1x32xf32>
    %40 = vector.extract_strided_slice %37 {offsets = [0, 0], sizes = [1, 32], strides = [1, 1]} : vector<2x32xf32> to vector<1x32xf32>
    %41 = arith.mulf %36, %40 : vector<1x32xf32>
    %cst_17 = arith.constant dense<0.000000e+00> : vector<1xf32>
    %42 = vector.multi_reduction <add>, %41, %cst_17 [1] : vector<1x32xf32> to vector<1xf32>
    %43 = vector.shape_cast %42 : vector<1xf32> to vector<1x1xf32>
    %cst_18 = arith.constant 0.000000e+00 : f32
    %44 = vector.broadcast %cst_18 : f32 to vector<1x1xf32>
    %45 = arith.maximumf %43, %44 : vector<1x1xf32>
    %46 = vector.extract_strided_slice %38 {offsets = [0, 0], sizes = [1, 32], strides = [1, 1]} : vector<2x32xf32> to vector<1x32xf32>
    %47 = vector.broadcast %45 : vector<1x1xf32> to vector<1x32xf32>
    %48 = arith.mulf %47, %46 : vector<1x32xf32>
    %49 = arith.addf %39, %48 : vector<1x32xf32>
    %50 = vector.extract_strided_slice %37 {offsets = [1, 0], sizes = [1, 32], strides = [1, 1]} : vector<2x32xf32> to vector<1x32xf32>
    %51 = arith.mulf %36, %50 : vector<1x32xf32>
    %cst_19 = arith.constant dense<0.000000e+00> : vector<1xf32>
    %52 = vector.multi_reduction <add>, %51, %cst_19 [1] : vector<1x32xf32> to vector<1xf32>
    %53 = vector.shape_cast %52 : vector<1xf32> to vector<1x1xf32>
    %cst_20 = arith.constant 0.000000e+00 : f32
    %54 = vector.broadcast %cst_20 : f32 to vector<1x1xf32>
    %55 = arith.maximumf %53, %54 : vector<1x1xf32>
    %56 = vector.extract_strided_slice %38 {offsets = [1, 0], sizes = [1, 32], strides = [1, 1]} : vector<2x32xf32> to vector<1x32xf32>
    %57 = vector.broadcast %55 : vector<1x1xf32> to vector<1x32xf32>
    %58 = arith.mulf %57, %56 : vector<1x32xf32>
    %59 = arith.addf %49, %58 : vector<1x32xf32>
    %60 = arith.negf %59 : vector<1x32xf32>
    %61 = math.exp %60 : vector<1x32xf32>
    %cst_21 = arith.constant 1.000000e+00 : f32
    %62 = vector.broadcast %cst_21 : f32 to vector<1x32xf32>
    %63 = arith.addf %62, %61 : vector<1x32xf32>
    %64 = arith.divf %62, %63 : vector<1x32xf32>
    %65 = vector.shape_cast %64 : vector<1x32xf32> to vector<1x1x32xf32>
    %66 = vector.broadcast %65 : vector<1x1x32xf32> to vector<1x64x32xf32>
    %67 = arith.mulf %33, %66 : vector<1x64x32xf32>
    %68 = arith.addf %67, %1 : vector<1x64x32xf32>
    %cst_22 = arith.constant 0.000000e+00 : f32
    %69 = vector.broadcast %cst_22 : f32 to vector<1x64x32xf32>
    %70 = arith.maximumf %68, %69 : vector<1x64x32xf32>
    %c0_23 = arith.constant 0 : index
    %c0_24 = arith.constant 0 : index
    %c0_25 = arith.constant 0 : index
    %71 = vector.load %arg6[%c0_23, %c0_24, %c0_25] : memref<1x64x32xf32, #tpu.memory_space<vmem>>, vector<1x64x32xf32>
    tpu.vector_store %arg6[%c0_23, %c0_24, %c0_25], %70 {strides = array<i32>} : memref<1x64x32xf32, #tpu.memory_space<vmem>>, vector<1x64x32xf32>,
    return
  }
  func.func @transform_0(%arg0: i32) -> (i32, i32, i32) {
    %c0_i32 = arith.constant 0 : i32
    %c0_i32_0 = arith.constant 0 : i32
    %c0_i32_1 = arith.constant 0 : i32
    return %arg0, %c0_i32, %c0_i32_0 : i32, i32, i32
  }
  func.func @transform_1(%arg0: i32) -> (i32, i32) {
    %c0_i32 = arith.constant 0 : i32
    %c0_i32_0 = arith.constant 0 : i32
    %c0_i32_1 = arith.constant 0 : i32
    return %c0_i32, %c0_i32_0 : i32, i32
  }
  func.func @transform_2(%arg0: i32) -> (i32, i32) {
    %c0_i32 = arith.constant 0 : i32
    %c0_i32_0 = arith.constant 0 : i32
    %c0_i32_1 = arith.constant 0 : i32
    return %c0_i32, %c0_i32_0 : i32, i32
  }
  func.func @transform_3(%arg0: i32) -> (i32, i32) {
    %c0_i32 = arith.constant 0 : i32
    %c0_i32_0 = arith.constant 0 : i32
    %c0_i32_1 = arith.constant 0 : i32
    return %c0_i32, %c0_i32_0 : i32, i32
  }
  func.func @transform_4(%arg0: i32) -> (i32, i32) {
    %c0_i32 = arith.constant 0 : i32
    %c0_i32_0 = arith.constant 0 : i32
    %c0_i32_1 = arith.constant 0 : i32
    return %c0_i32, %c0_i32_0 : i32, i32
  }
  func.func @transform_5(%arg0: i32) -> (i32, i32, i32) {
    %c0_i32 = arith.constant 0 : i32
    %c0_i32_0 = arith.constant 0 : i32
    %c0_i32_1 = arith.constant 0 : i32
    return %arg0, %c0_i32, %c0_i32_0 : i32, i32, i32
  }
}

</mosaic_0001>

<llo_original>
// kernel: tpu_custom_call.1
$region0: #{tpu_custom_call.1}
  #allocation0 [shape = 'u32[]', space=smem, size = 0x4, offset = 0x4, fixed_abs, tag = 'smem constant byte address 0x4 - core index']
  #allocation1 [shape = 'u32[144,128]{1,0:T(1,128)}', space=vmem, size = 0x12000, scoped, tag = 'internal scratch']
  %s0 = inlined_call_operand.vmem [shape: bf16[2,64,32], index: 0, kind: input, shape index: {}]
  %s1 = inlined_call_operand.vmem [shape: bf16[224,32], index: 1, kind: input, shape index: {}]
  %s2 = inlined_call_operand.vmem [shape: bf16[224,32], index: 2, kind: input, shape index: {}]
  %s3 = inlined_call_operand.vmem [shape: f32[2,32], index: 3, kind: input, shape index: {}]
  %s4 = inlined_call_operand.vmem [shape: f32[2,32], index: 4, kind: input, shape index: {}]
  %s5 = inlined_call_operand.vmem [shape: f32[2,64,32], index: 5, kind: output, shape index: {}]
  %s6 = sld [smem:[#allocation0]]
  $region53: #{tpu_custom_call.1} parent=0
    _
  %s8 = ssub.s32 1, %s6
  %s9 = scalar_select 0, %s8, %s6
  loop: start=0, step=1, limit=4
  $region2: #{tpu_custom_call.1} parent=0 // loop_pre_header
    _
  $region3: #{tpu_custom_call.1} parent=0 // loop_header
    %s11 = sphi 0, %s15
    %p12 = scmp.ge.s32.totalorder %s11, 4
    %s21 = sphi 0, %s23
    %s24 = sphi 0, %s21
    %s25 = sphi 0, %s24
    %s41 = sphi 0, %s25
    %s45 = sphi 0, %s45
    %s47 = sphi 0, %s45
    %s48 = sphi 0, %s47
    %s62 = sphi 0, %s48
    %s66 = sphi 0, %s66
    %s68 = sphi 0, %s66
    %s69 = sphi 0, %s68
    %s83 = sphi 0, %s69
    %s87 = sphi 0, %s87
    %s89 = sphi 0, %s87
    %s90 = sphi 0, %s89
    %s104 = sphi 0, %s90
    %s108 = sphi 0, %s108
    %s110 = sphi 0, %s108
    %s111 = sphi 0, %s110
    %s125 = sphi 0, %s111
    %s131 = sphi 0, %s133
    %s134 = sphi 0, %s131
    %s135 = sphi 0, %s134
    %s151 = sphi 0, %s135
  $region4: #{tpu_custom_call.1} parent=0 // loop_header_branch
    %14 = sbr.rel (%p12) target = $region8
  $region5: #{tpu_custom_call.1} parent=0 // loop_body
    %s16 = ssub.s32 %s11, 1
    %s17 = ssub.s32 %s11, 2
    %s18 = sadd.s32 %s11, 1
    %s19 = ssub.s32 %s11, %s18
    %p20 = scmp.eq.s32.totalorder %s19, 0
    %s22 = sadd.s32 %s21, 1
    %s23 = scalar_select %p20, %s21, %s22
    %p26 = pneg %p20
    %p27 = scmp.eq.s32.totalorder %s11, 1
    %p28 = por %p26, %p27
    %p29 = scmp.ne.s32.totalorder %s21, %s24
    %p30 = scmp.eq.s32.totalorder %s11, 0
    %p31 = por %p29, %p30
    %p32 = scmp.ne.s32.totalorder %s21, %s24
    %p33 = scmp.eq.s32.totalorder %s16, 1
    %p34 = por %p32, %p33
    %p35 = scmp.ne.s32.totalorder %s24, %s25
    %p36 = scmp.eq.s32.totalorder %s16, 0
    %p37 = por %p35, %p36
    %p38 = scmp.ne.s32.totalorder %s24, %s25
    %p39 = scmp.eq.s32.totalorder %s17, 1
    %p40 = por %p38, %p39
    %p42 = scmp.ne.s32.totalorder %s25, %s41
    %p43 = scmp.eq.s32.totalorder %s17, 0
    %p44 = por %p42, %p43
    %s46 = sadd.s32 %s45, 1
    %p49 = scmp.eq.s32.totalorder %s11, 1
    %p50 = scmp.ne.s32.totalorder %s45, %s47
    %p51 = scmp.eq.s32.totalorder %s11, 0
    %p52 = por %p50, %p51
    %p53 = scmp.ne.s32.totalorder %s45, %s47
    %p54 = scmp.eq.s32.totalorder %s16, 1
    %p55 = por %p53, %p54
    %p56 = scmp.ne.s32.totalorder %s47, %s48
    %p57 = scmp.eq.s32.totalorder %s16, 0
    %p58 = por %p56, %p57
    %p59 = scmp.ne.s32.totalorder %s47, %s48
    %p60 = scmp.eq.s32.totalorder %s17, 1
    %p61 = por %p59, %p60
    %p63 = scmp.ne.s32.totalorder %s48, %s62
    %p64 = scmp.eq.s32.totalorder %s17, 0
    %p65 = por %p63, %p64
    %s67 = sadd.s32 %s66, 1
    %p70 = scmp.eq.s32.totalorder %s11, 1
    %p71 = scmp.ne.s32.totalorder %s66, %s68
    %p72 = scmp.eq.s32.totalorder %s11, 0
    %p73 = por %p71, %p72
    %p74 = scmp.ne.s32.totalorder %s66, %s68
    %p75 = scmp.eq.s32.totalorder %s16, 1
    %p76 = por %p74, %p75
    %p77 = scmp.ne.s32.totalorder %s68, %s69
    %p78 = scmp.eq.s32.totalorder %s16, 0
    %p79 = por %p77, %p78
    %p80 = scmp.ne.s32.totalorder %s68, %s69
    %p81 = scmp.eq.s32.totalorder %s17, 1
    %p82 = por %p80, %p81
    %p84 = scmp.ne.s32.totalorder %s69, %s83
    %p85 = scmp.eq.s32.totalorder %s17, 0
    %p86 = por %p84, %p85
    %s88 = sadd.s32 %s87, 1
    %p91 = scmp.eq.s32.totalorder %s11, 1
    %p92 = scmp.ne.s32.totalorder %s87, %s89
    %p93 = scmp.eq.s32.totalorder %s11, 0
    %p94 = por %p92, %p93
    %p95 = scmp.ne.s32.totalorder %s87, %s89
    %p96 = scmp.eq.s32.totalorder %s16, 1
    %p97 = por %p95, %p96
    %p98 = scmp.ne.s32.totalorder %s89, %s90
    %p99 = scmp.eq.s32.totalorder %s16, 0
    %p100 = por %p98, %p99
    %p101 = scmp.ne.s32.totalorder %s89, %s90
    %p102 = scmp.eq.s32.totalorder %s17, 1
    %p103 = por %p101, %p102
    %p105 = scmp.ne.s32.totalorder %s90, %s104
    %p106 = scmp.eq.s32.totalorder %s17, 0
    %p107 = por %p105, %p106
    %s109 = sadd.s32 %s108, 1
    %p112 = scmp.eq.s32.totalorder %s11, 1
    %p113 = scmp.ne.s32.totalorder %s108, %s110
    %p114 = scmp.eq.s32.totalorder %s11, 0
    %p115 = por %p113, %p114
    %p116 = scmp.ne.s32.totalorder %s108, %s110
    %p117 = scmp.eq.s32.totalorder %s16, 1
    %p118 = por %p116, %p117
    %p119 = scmp.ne.s32.totalorder %s110, %s111
    %p120 = scmp.eq.s32.totalorder %s16, 0
    %p121 = por %p119, %p120
    %p122 = scmp.ne.s32.totalorder %s110, %s111
    %p123 = scmp.eq.s32.totalorder %s17, 1
    %p124 = por %p122, %p123
    %p126 = scmp.ne.s32.totalorder %s111, %s125
    %p127 = scmp.eq.s32.totalorder %s17, 0
    %p128 = por %p126, %p127
    %s129 = ssub.s32 %s11, %s18
    %p130 = scmp.eq.s32.totalorder %s129, 0
    %s132 = sadd.s32 %s131, 1
    %s133 = scalar_select %p130, %s131, %s132
    %p136 = pneg %p130
    %p137 = scmp.eq.s32.totalorder %s11, 1
    %p138 = por %p136, %p137
    %p139 = scmp.ne.s32.totalorder %s131, %s134
    %p140 = scmp.eq.s32.totalorder %s11, 0
    %p141 = por %p139, %p140
    %p142 = scmp.ne.s32.totalorder %s131, %s134
    %p143 = scmp.eq.s32.totalorder %s16, 1
    %p144 = por %p142, %p143
    %p145 = scmp.ne.s32.totalorder %s134, %s135
    %p146 = scmp.eq.s32.totalorder %s16, 0
    %p147 = por %p145, %p146
    %p148 = scmp.ne.s32.totalorder %s134, %s135
    %p149 = scmp.eq.s32.totalorder %s17, 1
    %p150 = por %p148, %p149
    %p152 = scmp.ne.s32.totalorder %s135, %s151
    %p153 = scmp.eq.s32.totalorder %s17, 0
    %p154 = por %p152, %p153
    %p155 = scmp.le.s32.totalorder 1, %s11
    %p156 = scmp.lt.s32.totalorder %s11, 3
    %p157 = pnand %p155, %p156
    %p158 = pneg %p157
    // Predicated region
    $region9: #{tpu_custom_call.1} parent=5 // pred_check
      _
    $region10: #{tpu_custom_call.1} parent=5 // pred_check_branch
      %160 = sbr.rel (%p157) target = $region12
    $region11: #{tpu_custom_call.1} parent=5 // pred_region
      %s161 = ssub.s32 %s11, 1
      // Predicated region
      $region13: #{tpu_custom_call.1} parent=11 // pred_check
        %p162 = pneg %p58
      $region14: #{tpu_custom_call.1} parent=11 // pred_check_branch
        %164 = sbr.rel (%p162) target = $region16
      $region15: #{tpu_custom_call.1} parent=11 // pred_region
        _
      $region16: #{tpu_custom_call.1} parent=11 // pred_fallthru
        _
      // Predicated region
      $region17: #{tpu_custom_call.1} parent=11 // pred_check
        %p165 = pneg %p79
      $region18: #{tpu_custom_call.1} parent=11 // pred_check_branch
        %167 = sbr.rel (%p165) target = $region20
      $region19: #{tpu_custom_call.1} parent=11 // pred_region
        _
      $region20: #{tpu_custom_call.1} parent=11 // pred_fallthru
        _
      // Predicated region
      $region21: #{tpu_custom_call.1} parent=11 // pred_check
        %p168 = pneg %p100
      $region22: #{tpu_custom_call.1} parent=11 // pred_check_branch
        %170 = sbr.rel (%p168) target = $region24
      $region23: #{tpu_custom_call.1} parent=11 // pred_region
        _
      $region24: #{tpu_custom_call.1} parent=11 // pred_fallthru
        _
      // Predicated region
      $region25: #{tpu_custom_call.1} parent=11 // pred_check
        %p171 = pneg %p121
      $region26: #{tpu_custom_call.1} parent=11 // pred_check_branch
        %173 = sbr.rel (%p171) target = $region28
      $region27: #{tpu_custom_call.1} parent=11 // pred_region
        _
      $region28: #{tpu_custom_call.1} parent=11 // pred_fallthru
        _
    $region12: #{tpu_custom_call.1} parent=5 // pred_fallthru
      _
    %p174 = scmp.lt.s32.totalorder %s11, 2
    // Predicated region
    $region29: #{tpu_custom_call.1} parent=5 // pred_check
      %p175 = pneg %p174
    $region30: #{tpu_custom_call.1} parent=5 // pred_check_branch
      %177 = sbr.rel (%p175) target = $region32
    $region31: #{tpu_custom_call.1} parent=5 // pred_region
      // Predicated region
      $region33: #{tpu_custom_call.1} parent=31 // pred_check
        %p178 = pneg %p31
      $region34: #{tpu_custom_call.1} parent=31 // pred_check_branch
        %180 = sbr.rel (%p178) target = $region36
      $region35: #{tpu_custom_call.1} parent=31 // pred_region
        %p181 = scmp.lt.s32.totalorder %s11, 1
        %s182 = scalar_select %p181, %s11, 1
        %s183 = smul.addr %s182, 8
        %s184 = smul.addr %s183, 4
        %s185 = scalar_lea.vmem %s0, %s184
      $region36: #{tpu_custom_call.1} parent=31 // pred_fallthru
        _
    $region32: #{tpu_custom_call.1} parent=5 // pred_fallthru
      _
    %p186 = scmp.le.s32.totalorder 1, %s11
    %p187 = scmp.lt.s32.totalorder %s11, 3
    %p188 = pnand %p186, %p187
    %p189 = pneg %p188
    // Predicated region
    $region37: #{tpu_custom_call.1} parent=5 // pred_check
      _
    $region38: #{tpu_custom_call.1} parent=5 // pred_check_branch
      %191 = sbr.rel (%p188) target = $region40
    $region39: #{tpu_custom_call.1} parent=5 // pred_region
      %s192 = ssub.s32 %s11, 1
      %p193 = scmp.lt.s32.totalorder %s16, 1
      %s194 = scalar_select %p193, %s16, 1
      %s195 = smul.addr %s194, 8
      %s196 = smul.addr %s195, 4
      %s197 = scalar_lea.vmem %s0, %s196
      %p198 = pneg %p37
      %p199 = pneg %p34
      %p200 = pneg %p58
      %p201 = pneg %p55
      %p202 = pneg %p79
      %p203 = pneg %p76
      %p204 = pneg %p100
      %p205 = pneg %p97
      %p206 = pneg %p121
      %p207 = pneg %p118
      %p208 = pneg %p147
      %p209 = pneg %p144
      %p210 = scmp.lt.s32.totalorder %s16, 1
      %s211 = scalar_select %p210, %s16, 1
      %s212 = smul.addr %s211, 8
      %s213 = smul.addr %s212, 8
      %s214 = scalar_lea.vmem %s5, %s213
      %p215 = scmp.lt.s32.totalorder %s16, 1
      %s216 = scalar_select %p215, %s16, 1
      %s217 = smul.addr %s216, 8
      %s218 = smul.addr %s217, 4
      %s219 = scalar_lea.vmem %s0, %s218
      %p220 = scmp.lt.s32.totalorder %s16, 1
      %s221 = scalar_select %p220, %s16, 1
      %s222 = smul.addr %s221, 8
      %s223 = smul.addr %s222, 8
      %s224 = scalar_lea.vmem %s5, %s223
      %v226 = vld [vmem:[%s219] sm:$0xf]
      %v227 = vld [vmem:[%s219 + $0x4] sm:$0xf]
      %v228 = vld [vmem:[%s219 + $0x8] sm:$0xf]
      %v229 = vld [vmem:[%s219 + $0xc] sm:$0xf]
      %v230 = vld [vmem:[%s219 + $0x10] sm:$0xf]
      %v231 = vld [vmem:[%s219 + $0x14] sm:$0xf]
      %v232 = vld [vmem:[%s219 + $0x18] sm:$0xf]
      %v233 = vld [vmem:[%s219 + $0x1c] sm:$0xf]
      %v234 = vunpack.c.l.bf16 %v226
      %v235 = vunpack.c.l.bf16 %v227
      %v236 = vunpack.c.l.bf16 %v228
      %v237 = vunpack.c.l.bf16 %v229
      %v238 = vunpack.c.l.bf16 %v230
      %v239 = vunpack.c.l.bf16 %v231
      %v240 = vunpack.c.l.bf16 %v232
      %v241 = vunpack.c.l.bf16 %v233
      %vm250 = vcmask 1042432
      %v251 = vrot.slane %v234, 5
      %v252 = vrot.slane %v235, 5
      %v253 = vsel %vm250, %v251, %v252
      %v254 = vrot.slane %v236, 5
      %v255 = vsel %vm250, %v252, %v254
      %v256 = vrot.slane %v237, 5
      %v257 = vsel %vm250, %v254, %v256
      %v258 = vrot.slane %v238, 5
      %v259 = vsel %vm250, %v256, %v258
      %v260 = vrot.slane %v239, 5
      %v261 = vsel %vm250, %v258, %v260
      %v262 = vrot.slane %v240, 5
      %v263 = vsel %vm250, %v260, %v262
      %v264 = vrot.slane %v241, 5
      %v265 = vsel %vm250, %v262, %v264
      %v275 = vsel %vm250, 0.0, %v251
      %v276 = vsel %vm250, %v264, 0.0
      %vm279 = vcmask 1046528
      %v280 = vrot.slane %v275, 1
      %v281 = vrot.slane %v253, 1
      %v282 = vsel %vm279, %v280, %v281
      %v283 = vrot.slane %v255, 1
      %v284 = vsel %vm279, %v281, %v283
      %v285 = vrot.slane %v257, 1
      %v286 = vsel %vm279, %v283, %v285
      %v287 = vrot.slane %v259, 1
      %v288 = vsel %vm279, %v285, %v287
      %v289 = vrot.slane %v261, 1
      %v290 = vsel %vm279, %v287, %v289
      %v291 = vrot.slane %v263, 1
      %v292 = vsel %vm279, %v289, %v291
      %v293 = vrot.slane %v265, 1
      %v294 = vsel %vm279, %v291, %v293
      %v295 = vrot.slane %v276, 1
      %v296 = vsel %vm279, %v293, %v295
      %297 = vrot.lane.b32.xlu0 %v282, 32
      %v298 = vpop.permute.xlu0 %297
      %299 = vrot.lane.b32.xlu0 %v284, 32
      %v300 = vpop.permute.xlu0 %299
      %301 = vrot.lane.b32.xlu0 %v286, 32
      %v302 = vpop.permute.xlu0 %301
      %303 = vrot.lane.b32.xlu0 %v288, 32
      %v304 = vpop.permute.xlu0 %303
      %305 = vrot.lane.b32.xlu0 %v290, 32
      %v306 = vpop.permute.xlu0 %305
      %307 = vrot.lane.b32.xlu0 %v292, 32
      %v308 = vpop.permute.xlu0 %307
      %309 = vrot.lane.b32.xlu0 %v294, 32
      %v310 = vpop.permute.xlu0 %309
      %311 = vrot.lane.b32.xlu0 %v296, 32
      %v312 = vpop.permute.xlu0 %311
      %vm321 = vcmask 1045504
      %v322 = vrot.slane %v275, 2
      %v323 = vrot.slane %v253, 2
      %v324 = vsel %vm321, %v322, %v323
      %v325 = vrot.slane %v255, 2
      %v326 = vsel %vm321, %v323, %v325
      %v327 = vrot.slane %v257, 2
      %v328 = vsel %vm321, %v325, %v327
      %v329 = vrot.slane %v259, 2
      %v330 = vsel %vm321, %v327, %v329
      %v331 = vrot.slane %v261, 2
      %v332 = vsel %vm321, %v329, %v331
      %v333 = vrot.slane %v263, 2
      %v334 = vsel %vm321, %v331, %v333
      %v335 = vrot.slane %v265, 2
      %v336 = vsel %vm321, %v333, %v335
      %v337 = vrot.slane %v276, 2
      %v338 = vsel %vm321, %v335, %v337
      %339 = vrot.lane.b32.xlu0 %v324, 64
      %v340 = vpop.permute.xlu0 %339
      %341 = vrot.lane.b32.xlu0 %v326, 64
      %v342 = vpop.permute.xlu0 %341
      %343 = vrot.lane.b32.xlu0 %v328, 64
      %v344 = vpop.permute.xlu0 %343
      %345 = vrot.lane.b32.xlu0 %v330, 64
      %v346 = vpop.permute.xlu0 %345
      %347 = vrot.lane.b32.xlu0 %v332, 64
      %v348 = vpop.permute.xlu0 %347
      %349 = vrot.lane.b32.xlu0 %v334, 64
      %v350 = vpop.permute.xlu0 %349
      %351 = vrot.lane.b32.xlu0 %v336, 64
      %v352 = vpop.permute.xlu0 %351
      %353 = vrot.lane.b32.xlu0 %v338, 64
      %v354 = vpop.permute.xlu0 %353
      %vm363 = vcmask 1044480
      %v364 = vrot.slane %v275, 3
      %v365 = vrot.slane %v253, 3
      %v366 = vsel %vm363, %v364, %v365
      %v367 = vrot.slane %v255, 3
      %v368 = vsel %vm363, %v365, %v367
      %v369 = vrot.slane %v257, 3
      %v370 = vsel %vm363, %v367, %v369
      %v371 = vrot.slane %v259, 3
      %v372 = vsel %vm363, %v369, %v371
      %v373 = vrot.slane %v261, 3
      %v374 = vsel %vm363, %v371, %v373
      %v375 = vrot.slane %v263, 3
      %v376 = vsel %vm363, %v373, %v375
      %v377 = vrot.slane %v265, 3
      %v378 = vsel %vm363, %v375, %v377
      %v379 = vrot.slane %v276, 3
      %v380 = vsel %vm363, %v377, %v379
      %381 = vrot.lane.b32.xlu0 %v366, 96
      %v382 = vpop.permute.xlu0 %381
      %383 = vrot.lane.b32.xlu0 %v368, 96
      %v384 = vpop.permute.xlu0 %383
      %385 = vrot.lane.b32.xlu0 %v370, 96
      %v386 = vpop.permute.xlu0 %385
      %387 = vrot.lane.b32.xlu0 %v372, 96
      %v388 = vpop.permute.xlu0 %387
      %389 = vrot.lane.b32.xlu0 %v374, 96
      %v390 = vpop.permute.xlu0 %389
      %391 = vrot.lane.b32.xlu0 %v376, 96
      %v392 = vpop.permute.xlu0 %391
      %393 = vrot.lane.b32.xlu0 %v378, 96
      %v394 = vpop.permute.xlu0 %393
      %395 = vrot.lane.b32.xlu0 %v380, 96
      %v396 = vpop.permute.xlu0 %395
      %vm405 = vcmask 1043456
      %v406 = vrot.slane %v275, 4
      %v407 = vrot.slane %v253, 4
      %v408 = vsel %vm405, %v406, %v407
      %v409 = vrot.slane %v255, 4
      %v410 = vsel %vm405, %v407, %v409
      %v411 = vrot.slane %v257, 4
      %v412 = vsel %vm405, %v409, %v411
      %v413 = vrot.slane %v259, 4
      %v414 = vsel %vm405, %v411, %v413
      %v415 = vrot.slane %v261, 4
      %v416 = vsel %vm405, %v413, %v415
      %v417 = vrot.slane %v263, 4
      %v418 = vsel %vm405, %v415, %v417
      %v419 = vrot.slane %v265, 4
      %v420 = vsel %vm405, %v417, %v419
      %v421 = vrot.slane %v276, 4
      %v422 = vsel %vm405, %v419, %v421
      %v431 = vrot.slane %v275, 5
      %v432 = vrot.slane %v253, 5
      %v433 = vsel %vm250, %v431, %v432
      %v434 = vrot.slane %v255, 5
      %v435 = vsel %vm250, %v432, %v434
      %v436 = vrot.slane %v257, 5
      %v437 = vsel %vm250, %v434, %v436
      %v438 = vrot.slane %v259, 5
      %v439 = vsel %vm250, %v436, %v438
      %v440 = vrot.slane %v261, 5
      %v441 = vsel %vm250, %v438, %v440
      %v442 = vrot.slane %v263, 5
      %v443 = vsel %vm250, %v440, %v442
      %v444 = vrot.slane %v265, 5
      %v445 = vsel %vm250, %v442, %v444
      %v446 = vrot.slane %v276, 5
      %v447 = vsel %vm250, %v444, %v446
      %448 = vrot.lane.b32.xlu0 %v433, 32
      %v449 = vpop.permute.xlu0 %448
      %450 = vrot.lane.b32.xlu0 %v435, 32
      %v451 = vpop.permute.xlu0 %450
      %452 = vrot.lane.b32.xlu0 %v437, 32
      %v453 = vpop.permute.xlu0 %452
      %454 = vrot.lane.b32.xlu0 %v439, 32
      %v455 = vpop.permute.xlu0 %454
      %456 = vrot.lane.b32.xlu0 %v441, 32
      %v457 = vpop.permute.xlu0 %456
      %458 = vrot.lane.b32.xlu0 %v443, 32
      %v459 = vpop.permute.xlu0 %458
      %460 = vrot.lane.b32.xlu0 %v445, 32
      %v461 = vpop.permute.xlu0 %460
      %462 = vrot.lane.b32.xlu0 %v447, 32
      %v463 = vpop.permute.xlu0 %462
      %vm472 = vcmask 1041408
      %v473 = vrot.slane %v275, 6
      %v474 = vrot.slane %v253, 6
      %v475 = vsel %vm472, %v473, %v474
      %v476 = vrot.slane %v255, 6
      %v477 = vsel %vm472, %v474, %v476
      %v478 = vrot.slane %v257, 6
      %v479 = vsel %vm472, %v476, %v478
      %v480 = vrot.slane %v259, 6
      %v481 = vsel %vm472, %v478, %v480
      %v482 = vrot.slane %v261, 6
      %v483 = vsel %vm472, %v480, %v482
      %v484 = vrot.slane %v263, 6
      %v485 = vsel %vm472, %v482, %v484
      %v486 = vrot.slane %v265, 6
      %v487 = vsel %vm472, %v484, %v486
      %v488 = vrot.slane %v276, 6
      %v489 = vsel %vm472, %v486, %v488
      %490 = vrot.lane.b32.xlu0 %v475, 64
      %v491 = vpop.permute.xlu0 %490
      %492 = vrot.lane.b32.xlu0 %v477, 64
      %v493 = vpop.permute.xlu0 %492
      %494 = vrot.lane.b32.xlu0 %v479, 64
      %v495 = vpop.permute.xlu0 %494
      %496 = vrot.lane.b32.xlu0 %v481, 64
      %v497 = vpop.permute.xlu0 %496
      %498 = vrot.lane.b32.xlu0 %v483, 64
      %v499 = vpop.permute.xlu0 %498
      %500 = vrot.lane.b32.xlu0 %v485, 64
      %v501 = vpop.permute.xlu0 %500
      %502 = vrot.lane.b32.xlu0 %v487, 64
      %v503 = vpop.permute.xlu0 %502
      %504 = vrot.lane.b32.xlu0 %v489, 64
      %v505 = vpop.permute.xlu0 %504
      %vm514 = vcmask 261120
      %v515 = vsel %vm514, %v275, %v298
      %v516 = vsel %vm514, %v253, %v300
      %v517 = vsel %vm514, %v255, %v302
      %v518 = vsel %vm514, %v257, %v304
      %v519 = vsel %vm514, %v259, %v306
      %v520 = vsel %vm514, %v261, %v308
      %v521 = vsel %vm514, %v263, %v310
      %v522 = vsel %vm514, %v265, %v312
      %vm523 = vcmask 523264
      %v524 = vsel %vm523, %v515, %v340
      %v525 = vsel %vm523, %v516, %v342
      %v526 = vsel %vm523, %v517, %v344
      %v527 = vsel %vm523, %v518, %v346
      %v528 = vsel %vm523, %v519, %v348
      %v529 = vsel %vm523, %v520, %v350
      %v530 = vsel %vm523, %v521, %v352
      %v531 = vsel %vm523, %v522, %v354
      %vm532 = vcmask 785408
      %v533 = vsel %vm532, %v524, %v382
      %v534 = vsel %vm532, %v525, %v384
      %v535 = vsel %vm532, %v526, %v386
      %v536 = vsel %vm532, %v527, %v388
      %v537 = vsel %vm532, %v528, %v390
      %v538 = vsel %vm532, %v529, %v392
      %v539 = vsel %vm532, %v530, %v394
      %v540 = vsel %vm532, %v531, %v396
      %v541 = vsel %vm514, %v408, %v449
      %v542 = vsel %vm514, %v410, %v451
      %v543 = vsel %vm514, %v412, %v453
      %v544 = vsel %vm514, %v414, %v455
      %v545 = vsel %vm514, %v416, %v457
      %v546 = vsel %vm514, %v418, %v459
      %v547 = vsel %vm514, %v420, %v461
      %v548 = vsel %vm514, %v422, %v463
      %v549 = vsel %vm523, %v541, %v491
      %v550 = vsel %vm523, %v542, %v493
      %v551 = vsel %vm523, %v543, %v495
      %v552 = vsel %vm523, %v544, %v497
      %v553 = vsel %vm523, %v545, %v499
      %v554 = vsel %vm523, %v546, %v501
      %v555 = vsel %vm523, %v547, %v503
      %v556 = vsel %vm523, %v548, %v505
      %v557 = vpack.c.bf16 %v534, %v533
      %v558 = vpack.c.bf16 %v550, %v549
      %v559 = vpack.c.bf16 %v536, %v535
      %v560 = vpack.c.bf16 %v552, %v551
      %v561 = vpack.c.bf16 %v538, %v537
      %v562 = vpack.c.bf16 %v554, %v553
      %v563 = vpack.c.bf16 %v540, %v539
      %v564 = vpack.c.bf16 %v556, %v555
      %v565 = vld [vmem:[%s1] sm:$0xf]
      %v566 = vld [vmem:[%s1 + $0x4] sm:$0xf]
      %v567 = vld [vmem:[%s1 + $0x8] sm:$0xf]
      %v568 = vld [vmem:[%s1 + $0xc] sm:$0xf]
      %v569 = vld [vmem:[%s1 + $0x10] sm:$0xf]
      %v570 = vld [vmem:[%s1 + $0x14] sm:$0xf]
      %v571 = vld [vmem:[%s1 + $0x18] sm:$0xf]
      %v572 = vld [vmem:[%s1 + $0x1c] sm:$0xf]
      %v573 = vld [vmem:[%s1 + $0x20] sm:$0xf]
      %v574 = vld [vmem:[%s1 + $0x24] sm:$0xf]
      %v575 = vld [vmem:[%s1 + $0x28] sm:$0xf]
      %v576 = vld [vmem:[%s1 + $0x2c] sm:$0xf]
      %v577 = vld [vmem:[%s1 + $0x30] sm:$0xf]
      %v578 = vld [vmem:[%s1 + $0x34] sm:$0xf]
      %v579 = vld [vmem:[%s1 + $0x38] sm:$0xf]
      %v580 = vld [vmem:[%s1 + $0x3c] sm:$0xf]
      %v581 = vld [vmem:[%s1 + $0x40] sm:$0xf]
      %v582 = vld [vmem:[%s1 + $0x44] sm:$0xf]
      %v583 = vld [vmem:[%s1 + $0x48] sm:$0xf]
      %v584 = vld [vmem:[%s1 + $0x4c] sm:$0xf]
      %v585 = vld [vmem:[%s1 + $0x50] sm:$0xf]
      %v586 = vld [vmem:[%s1 + $0x54] sm:$0xf]
      %v587 = vld [vmem:[%s1 + $0x58] sm:$0xf]
      %v588 = vld [vmem:[%s1 + $0x5c] sm:$0xf]
      %v589 = vld [vmem:[%s1 + $0x60] sm:$0xf]
      %v590 = vld [vmem:[%s1 + $0x64] sm:$0xf]
      %v591 = vld [vmem:[%s1 + $0x68] sm:$0xf]
      %v592 = vld [vmem:[%s1 + $0x6c] sm:$0xf]
      %v621 = vunpack.c.l.b16 %v565
      %v622 = vunpack.c.l.b16 %v566
      %v623 = vunpack.c.l.b16 %v567
      %v624 = vunpack.c.l.b16 %v568
      %v625 = vunpack.c.l.b16 %v569
      %v626 = vunpack.c.l.b16 %v570
      %v627 = vunpack.c.l.b16 %v571
      %v628 = vunpack.c.l.b16 %v572
      %v629 = vunpack.c.l.b16 %v573
      %v630 = vunpack.c.l.b16 %v574
      %v631 = vunpack.c.l.b16 %v575
      %v632 = vunpack.c.l.b16 %v576
      %v633 = vunpack.c.l.b16 %v577
      %v634 = vunpack.c.l.b16 %v578
      %v635 = vunpack.c.l.b16 %v579
      %v636 = vunpack.c.l.b16 %v580
      %v637 = vunpack.c.l.b16 %v581
      %v638 = vunpack.c.l.b16 %v582
      %v639 = vunpack.c.l.b16 %v583
      %v640 = vunpack.c.l.b16 %v584
      %v641 = vunpack.c.l.b16 %v585
      %v642 = vunpack.c.l.b16 %v586
      %v643 = vunpack.c.l.b16 %v587
      %v644 = vunpack.c.l.b16 %v588
      %v645 = vunpack.c.l.b16 %v589
      %v646 = vunpack.c.l.b16 %v590
      %v647 = vunpack.c.l.b16 %v591
      %v648 = vunpack.c.l.b16 %v592
      %v649 = vpack.c.b16 %v622, %v621
      %v650 = vpack.c.b16 %v624, %v623
      %v651 = vpack.c.b16 %v626, %v625
      %v652 = vpack.c.b16 %v628, %v627
      %v653 = vpack.c.b16 %v630, %v629
      %v654 = vpack.c.b16 %v632, %v631
      %v655 = vpack.c.b16 %v634, %v633
      %v656 = vpack.c.b16 %v636, %v635
      %v657 = vpack.c.b16 %v638, %v637
      %v658 = vpack.c.b16 %v640, %v639
      %v659 = vpack.c.b16 %v642, %v641
      %v660 = vpack.c.b16 %v644, %v643
      %v661 = vpack.c.b16 %v646, %v645
      %v662 = vpack.c.b16 %v648, %v647
      %v678 = vsel %vm532, %v558, 0
      %v681 = vsel %vm532, %v560, 0
      %v684 = vsel %vm532, %v562, 0
      %v687 = vsel %vm532, %v564, 0
      %689 = vmatprep.subr.bf16.mxu0 0
      %690 = vmatpush1.bf16.msra.mxu0 %v649
      %691 = vmatprep.subr.bf16.mxu0 0
      %692 = vmatpush1.bf16.msra.mxu0 %v650
      %693 = vmatprep.subr.bf16.mxu0 0
      %694 = vmatpush1.bf16.msra.mxu0 %v651
      %695 = vmatprep.subr.bf16.mxu0 0
      %696 = vmatpush1.bf16.msra.mxu0 %v652
      %697 = vmatprep.subr.bf16.mxu0 0
      %698 = vmatpush1.bf16.msra.mxu0 %v653
      %699 = vmatprep.subr.bf16.mxu0 0
      %700 = vmatpush1.bf16.msra.mxu0 %v654
      %701 = vmatprep.subr.bf16.mxu0 0
      %702 = vmatpush1.bf16.msra.mxu0 %v655
      %703 = vmatprep.subr.bf16.mxu0 0
      %704 = vmatpush1.bf16.msra.mxu0 %v656
      %705 = vmatprep.subr.bf16.mxu0 0
      %706 = vmatpush1.bf16.msra.mxu0 %v657
      %707 = vmatprep.subr.bf16.mxu0 0
      %708 = vmatpush1.bf16.msra.mxu0 %v658
      %709 = vmatprep.subr.bf16.mxu0 0
      %710 = vmatpush1.bf16.msra.mxu0 %v659
      %711 = vmatprep.subr.bf16.mxu0 0
      %712 = vmatpush1.bf16.msra.mxu0 %v660
      %713 = vmatprep.subr.bf16.mxu0 0
      %714 = vmatpush1.bf16.msra.mxu0 %v661
      %715 = vmatprep.subr.bf16.mxu0 0
      %716 = vmatpush1.bf16.msra.mxu0 %v662
      %717 = vmatprep.subr.bf16.mxu0 0
      %718 = vmatpush1.bf16.msra.mxu0 0
      %719 = vmatprep.subr.bf16.mxu0 0
      %720 = vmatpush1.bf16.msra.mxu0 0
      %721 = vmatprep.mubr.bf16.mxu0 %v678
      %722 = vmatmul.mubr.bf16.gmra.mrb[0].mxu0 %v557
      %v723 = vpop.f32.mrb[0].mxu0
      %v724 = vadd.f32 0.0, %v723
      %v725 = vpop.f32.mrb[0].mxu0
      %v726 = vpop.f32.mrb[0].mxu0
      %v727 = vadd.f32 0.0, %v726
      %v728 = vpop.f32.mrb[0].mxu0
      %729 = vmatprep.mubr.bf16.mxu0 %v681
      %730 = vmatmul.mubr.bf16.gmra.mrb[0].mxu0 %v559
      %v731 = vpop.f32.mrb[0].mxu0
      %v732 = vadd.f32 0.0, %v731
      %v733 = vpop.f32.mrb[0].mxu0
      %v734 = vpop.f32.mrb[0].mxu0
      %v735 = vadd.f32 0.0, %v734
      %v736 = vpop.f32.mrb[0].mxu0
      %737 = vmatprep.mubr.bf16.mxu0 %v684
      %738 = vmatmul.mubr.bf16.gmra.mrb[0].mxu0 %v561
      %v739 = vpop.f32.mrb[0].mxu0
      %v740 = vadd.f32 0.0, %v739
      %v741 = vpop.f32.mrb[0].mxu0
      %v742 = vpop.f32.mrb[0].mxu0
      %v743 = vadd.f32 0.0, %v742
      %v744 = vpop.f32.mrb[0].mxu0
      %745 = vmatprep.mubr.bf16.mxu0 %v687
      %746 = vmatmul.mubr.bf16.gmra.mrb[0].mxu0 %v563
      %v747 = vpop.f32.mrb[0].mxu0
      %v748 = vadd.f32 0.0, %v747
      %v749 = vpop.f32.mrb[0].mxu0
      %v750 = vpop.f32.mrb[0].mxu0
      %v751 = vadd.f32 0.0, %v750
      %v752 = vpop.f32.mrb[0].mxu0
      %753 = vdwg.mxu0
      %v754 = vmax.f32 %v724, 0.0
      %v755 = vmax.f32 %v727, 0.0
      %v756 = vmax.f32 %v732, 0.0
      %v757 = vmax.f32 %v735, 0.0
      %v758 = vmax.f32 %v740, 0.0
      %v759 = vmax.f32 %v743, 0.0
      %v760 = vmax.f32 %v748, 0.0
      %v761 = vmax.f32 %v751, 0.0
      %v770 = vrot.slane %v754, 5
      %v771 = vrot.slane %v755, 5
      %v772 = vsel %vm250, %v770, %v771
      %v773 = vrot.slane %v756, 5
      %v774 = vsel %vm250, %v771, %v773
      %v775 = vrot.slane %v757, 5
      %v776 = vsel %vm250, %v773, %v775
      %v777 = vrot.slane %v758, 5
      %v778 = vsel %vm250, %v775, %v777
      %v779 = vrot.slane %v759, 5
      %v780 = vsel %vm250, %v777, %v779
      %v781 = vrot.slane %v760, 5
      %v782 = vsel %vm250, %v779, %v781
      %v783 = vrot.slane %v761, 5
      %v784 = vsel %vm250, %v781, %v783
      %v794 = vsel %vm250, 0.0, %v770
      %v795 = vsel %vm250, %v783, 0.0
      %v798 = vrot.slane %v794, 1
      %v799 = vrot.slane %v772, 1
      %v800 = vsel %vm279, %v798, %v799
      %v801 = vrot.slane %v774, 1
      %v802 = vsel %vm279, %v799, %v801
      %v803 = vrot.slane %v776, 1
      %v804 = vsel %vm279, %v801, %v803
      %v805 = vrot.slane %v778, 1
      %v806 = vsel %vm279, %v803, %v805
      %v807 = vrot.slane %v780, 1
      %v808 = vsel %vm279, %v805, %v807
      %v809 = vrot.slane %v782, 1
      %v810 = vsel %vm279, %v807, %v809
      %v811 = vrot.slane %v784, 1
      %v812 = vsel %vm279, %v809, %v811
      %v813 = vrot.slane %v795, 1
      %v814 = vsel %vm279, %v811, %v813
      %815 = vrot.lane.b32.xlu0 %v800, 32
      %v816 = vpop.permute.xlu0 %815
      %817 = vrot.lane.b32.xlu0 %v802, 32
      %v818 = vpop.permute.xlu0 %817
      %819 = vrot.lane.b32.xlu0 %v804, 32
      %v820 = vpop.permute.xlu0 %819
      %821 = vrot.lane.b32.xlu0 %v806, 32
      %v822 = vpop.permute.xlu0 %821
      %823 = vrot.lane.b32.xlu0 %v808, 32
      %v824 = vpop.permute.xlu0 %823
      %825 = vrot.lane.b32.xlu0 %v810, 32
      %v826 = vpop.permute.xlu0 %825
      %827 = vrot.lane.b32.xlu0 %v812, 32
      %v828 = vpop.permute.xlu0 %827
      %829 = vrot.lane.b32.xlu0 %v814, 32
      %v830 = vpop.permute.xlu0 %829
      %v839 = vrot.slane %v794, 2
      %v840 = vrot.slane %v772, 2
      %v841 = vsel %vm321, %v839, %v840
      %v842 = vrot.slane %v774, 2
      %v843 = vsel %vm321, %v840, %v842
      %v844 = vrot.slane %v776, 2
      %v845 = vsel %vm321, %v842, %v844
      %v846 = vrot.slane %v778, 2
      %v847 = vsel %vm321, %v844, %v846
      %v848 = vrot.slane %v780, 2
      %v849 = vsel %vm321, %v846, %v848
      %v850 = vrot.slane %v782, 2
      %v851 = vsel %vm321, %v848, %v850
      %v852 = vrot.slane %v784, 2
      %v853 = vsel %vm321, %v850, %v852
      %v854 = vrot.slane %v795, 2
      %v855 = vsel %vm321, %v852, %v854
      %856 = vrot.lane.b32.xlu0 %v841, 64
      %v857 = vpop.permute.xlu0 %856
      %858 = vrot.lane.b32.xlu0 %v843, 64
      %v859 = vpop.permute.xlu0 %858
      %860 = vrot.lane.b32.xlu0 %v845, 64
      %v861 = vpop.permute.xlu0 %860
      %862 = vrot.lane.b32.xlu0 %v847, 64
      %v863 = vpop.permute.xlu0 %862
      %864 = vrot.lane.b32.xlu0 %v849, 64
      %v865 = vpop.permute.xlu0 %864
      %866 = vrot.lane.b32.xlu0 %v851, 64
      %v867 = vpop.permute.xlu0 %866
      %868 = vrot.lane.b32.xlu0 %v853, 64
      %v869 = vpop.permute.xlu0 %868
      %870 = vrot.lane.b32.xlu0 %v855, 64
      %v871 = vpop.permute.xlu0 %870
      %v880 = vrot.slane %v794, 3
      %v881 = vrot.slane %v772, 3
      %v882 = vsel %vm363, %v880, %v881
      %v883 = vrot.slane %v774, 3
      %v884 = vsel %vm363, %v881, %v883
      %v885 = vrot.slane %v776, 3
      %v886 = vsel %vm363, %v883, %v885
      %v887 = vrot.slane %v778, 3
      %v888 = vsel %vm363, %v885, %v887
      %v889 = vrot.slane %v780, 3
      %v890 = vsel %vm363, %v887, %v889
      %v891 = vrot.slane %v782, 3
      %v892 = vsel %vm363, %v889, %v891
      %v893 = vrot.slane %v784, 3
      %v894 = vsel %vm363, %v891, %v893
      %v895 = vrot.slane %v795, 3
      %v896 = vsel %vm363, %v893, %v895
      %897 = vrot.lane.b32.xlu0 %v882, 96
      %v898 = vpop.permute.xlu0 %897
      %899 = vrot.lane.b32.xlu0 %v884, 96
      %v900 = vpop.permute.xlu0 %899
      %901 = vrot.lane.b32.xlu0 %v886, 96
      %v902 = vpop.permute.xlu0 %901
      %903 = vrot.lane.b32.xlu0 %v888, 96
      %v904 = vpop.permute.xlu0 %903
      %905 = vrot.lane.b32.xlu0 %v890, 96
      %v906 = vpop.permute.xlu0 %905
      %907 = vrot.lane.b32.xlu0 %v892, 96
      %v908 = vpop.permute.xlu0 %907
      %909 = vrot.lane.b32.xlu0 %v894, 96
      %v910 = vpop.permute.xlu0 %909
      %911 = vrot.lane.b32.xlu0 %v896, 96
      %v912 = vpop.permute.xlu0 %911
      %v921 = vrot.slane %v794, 4
      %v922 = vrot.slane %v772, 4
      %v923 = vsel %vm405, %v921, %v922
      %v924 = vrot.slane %v774, 4
      %v925 = vsel %vm405, %v922, %v924
      %v926 = vrot.slane %v776, 4
      %v927 = vsel %vm405, %v924, %v926
      %v928 = vrot.slane %v778, 4
      %v929 = vsel %vm405, %v926, %v928
      %v930 = vrot.slane %v780, 4
      %v931 = vsel %vm405, %v928, %v930
      %v932 = vrot.slane %v782, 4
      %v933 = vsel %vm405, %v930, %v932
      %v934 = vrot.slane %v784, 4
      %v935 = vsel %vm405, %v932, %v934
      %v936 = vrot.slane %v795, 4
      %v937 = vsel %vm405, %v934, %v936
      %v946 = vrot.slane %v794, 5
      %v947 = vrot.slane %v772, 5
      %v948 = vsel %vm250, %v946, %v947
      %v949 = vrot.slane %v774, 5
      %v950 = vsel %vm250, %v947, %v949
      %v951 = vrot.slane %v776, 5
      %v952 = vsel %vm250, %v949, %v951
      %v953 = vrot.slane %v778, 5
      %v954 = vsel %vm250, %v951, %v953
      %v955 = vrot.slane %v780, 5
      %v956 = vsel %vm250, %v953, %v955
      %v957 = vrot.slane %v782, 5
      %v958 = vsel %vm250, %v955, %v957
      %v959 = vrot.slane %v784, 5
      %v960 = vsel %vm250, %v957, %v959
      %v961 = vrot.slane %v795, 5
      %v962 = vsel %vm250, %v959, %v961
      %963 = vrot.lane.b32.xlu0 %v948, 32
      %v964 = vpop.permute.xlu0 %963
      %965 = vrot.lane.b32.xlu0 %v950, 32
      %v966 = vpop.permute.xlu0 %965
      %967 = vrot.lane.b32.xlu0 %v952, 32
      %v968 = vpop.permute.xlu0 %967
      %969 = vrot.lane.b32.xlu0 %v954, 32
      %v970 = vpop.permute.xlu0 %969
      %971 = vrot.lane.b32.xlu0 %v956, 32
      %v972 = vpop.permute.xlu0 %971
      %973 = vrot.lane.b32.xlu0 %v958, 32
      %v974 = vpop.permute.xlu0 %973
      %975 = vrot.lane.b32.xlu0 %v960, 32
      %v976 = vpop.permute.xlu0 %975
      %977 = vrot.lane.b32.xlu0 %v962, 32
      %v978 = vpop.permute.xlu0 %977
      %v987 = vrot.slane %v794, 6
      %v988 = vrot.slane %v772, 6
      %v989 = vsel %vm472, %v987, %v988
      %v990 = vrot.slane %v774, 6
      %v991 = vsel %vm472, %v988, %v990
      %v992 = vrot.slane %v776, 6
      %v993 = vsel %vm472, %v990, %v992
      %v994 = vrot.slane %v778, 6
      %v995 = vsel %vm472, %v992, %v994
      %v996 = vrot.slane %v780, 6
      %v997 = vsel %vm472, %v994, %v996
      %v998 = vrot.slane %v782, 6
      %v999 = vsel %vm472, %v996, %v998
      %v1000 = vrot.slane %v784, 6
      %v1001 = vsel %vm472, %v998, %v1000
      %v1002 = vrot.slane %v795, 6
      %v1003 = vsel %vm472, %v1000, %v1002
      %1004 = vrot.lane.b32.xlu0 %v989, 64
      %v1005 = vpop.permute.xlu0 %1004
      %1006 = vrot.lane.b32.xlu0 %v991, 64
      %v1007 = vpop.permute.xlu0 %1006
      %1008 = vrot.lane.b32.xlu0 %v993, 64
      %v1009 = vpop.permute.xlu0 %1008
      %1010 = vrot.lane.b32.xlu0 %v995, 64
      %v1011 = vpop.permute.xlu0 %1010
      %1012 = vrot.lane.b32.xlu0 %v997, 64
      %v1013 = vpop.permute.xlu0 %1012
      %1014 = vrot.lane.b32.xlu0 %v999, 64
      %v1015 = vpop.permute.xlu0 %1014
      %1016 = vrot.lane.b32.xlu0 %v1001, 64
      %v1017 = vpop.permute.xlu0 %1016
      %1018 = vrot.lane.b32.xlu0 %v1003, 64
      %v1019 = vpop.permute.xlu0 %1018
      %v1028 = vsel %vm514, %v794, %v816
      %v1029 = vsel %vm514, %v772, %v818
      %v1030 = vsel %vm514, %v774, %v820
      %v1031 = vsel %vm514, %v776, %v822
      %v1032 = vsel %vm514, %v778, %v824
      %v1033 = vsel %vm514, %v780, %v826
      %v1034 = vsel %vm514, %v782, %v828
      %v1035 = vsel %vm514, %v784, %v830
      %v1036 = vsel %vm523, %v1028, %v857
      %v1037 = vsel %vm523, %v1029, %v859
      %v1038 = vsel %vm523, %v1030, %v861
      %v1039 = vsel %vm523, %v1031, %v863
      %v1040 = vsel %vm523, %v1032, %v865
      %v1041 = vsel %vm523, %v1033, %v867
      %v1042 = vsel %vm523, %v1034, %v869
      %v1043 = vsel %vm523, %v1035, %v871
      %v1044 = vsel %vm532, %v1036, %v898
      %v1045 = vsel %vm532, %v1037, %v900
      %v1046 = vsel %vm532, %v1038, %v902
      %v1047 = vsel %vm532, %v1039, %v904
      %v1048 = vsel %vm532, %v1040, %v906
      %v1049 = vsel %vm532, %v1041, %v908
      %v1050 = vsel %vm532, %v1042, %v910
      %v1051 = vsel %vm532, %v1043, %v912
      %v1052 = vsel %vm514, %v923, %v964
      %v1053 = vsel %vm514, %v925, %v966
      %v1054 = vsel %vm514, %v927, %v968
      %v1055 = vsel %vm514, %v929, %v970
      %v1056 = vsel %vm514, %v931, %v972
      %v1057 = vsel %vm514, %v933, %v974
      %v1058 = vsel %vm514, %v935, %v976
      %v1059 = vsel %vm514, %v937, %v978
      %v1060 = vsel %vm523, %v1052, %v1005
      %v1061 = vsel %vm523, %v1053, %v1007
      %v1062 = vsel %vm523, %v1054, %v1009
      %v1063 = vsel %vm523, %v1055, %v1011
      %v1064 = vsel %vm523, %v1056, %v1013
      %v1065 = vsel %vm523, %v1057, %v1015
      %v1066 = vsel %vm523, %v1058, %v1017
      %v1067 = vsel %vm523, %v1059, %v1019
      %v1068 = vpack.c.bf16 %v1045, %v1044
      %v1069 = vpack.c.bf16 %v1061, %v1060
      %v1070 = vpack.c.bf16 %v1047, %v1046
      %v1071 = vpack.c.bf16 %v1063, %v1062
      %v1072 = vpack.c.bf16 %v1049, %v1048
      %v1073 = vpack.c.bf16 %v1065, %v1064
      %v1074 = vpack.c.bf16 %v1051, %v1050
      %v1075 = vpack.c.bf16 %v1067, %v1066
      %v1076 = vld [vmem:[%s2] sm:$0xf]
      %v1077 = vld [vmem:[%s2 + $0x4] sm:$0xf]
      %v1078 = vld [vmem:[%s2 + $0x8] sm:$0xf]
      %v1079 = vld [vmem:[%s2 + $0xc] sm:$0xf]
      %v1080 = vld [vmem:[%s2 + $0x10] sm:$0xf]
      %v1081 = vld [vmem:[%s2 + $0x14] sm:$0xf]
      %v1082 = vld [vmem:[%s2 + $0x18] sm:$0xf]
      %v1083 = vld [vmem:[%s2 + $0x1c] sm:$0xf]
      %v1084 = vld [vmem:[%s2 + $0x20] sm:$0xf]
      %v1085 = vld [vmem:[%s2 + $0x24] sm:$0xf]
      %v1086 = vld [vmem:[%s2 + $0x28] sm:$0xf]
      %v1087 = vld [vmem:[%s2 + $0x2c] sm:$0xf]
      %v1088 = vld [vmem:[%s2 + $0x30] sm:$0xf]
      %v1089 = vld [vmem:[%s2 + $0x34] sm:$0xf]
      %v1090 = vld [vmem:[%s2 + $0x38] sm:$0xf]
      %v1091 = vld [vmem:[%s2 + $0x3c] sm:$0xf]
      %v1092 = vld [vmem:[%s2 + $0x40] sm:$0xf]
      %v1093 = vld [vmem:[%s2 + $0x44] sm:$0xf]
      %v1094 = vld [vmem:[%s2 + $0x48] sm:$0xf]
      %v1095 = vld [vmem:[%s2 + $0x4c] sm:$0xf]
      %v1096 = vld [vmem:[%s2 + $0x50] sm:$0xf]
      %v1097 = vld [vmem:[%s2 + $0x54] sm:$0xf]
      %v1098 = vld [vmem:[%s2 + $0x58] sm:$0xf]
      %v1099 = vld [vmem:[%s2 + $0x5c] sm:$0xf]
      %v1100 = vld [vmem:[%s2 + $0x60] sm:$0xf]
      %v1101 = vld [vmem:[%s2 + $0x64] sm:$0xf]
      %v1102 = vld [vmem:[%s2 + $0x68] sm:$0xf]
      %v1103 = vld [vmem:[%s2 + $0x6c] sm:$0xf]
      %v1132 = vunpack.c.l.b16 %v1076
      %v1133 = vunpack.c.l.b16 %v1077
      %v1134 = vunpack.c.l.b16 %v1078
      %v1135 = vunpack.c.l.b16 %v1079
      %v1136 = vunpack.c.l.b16 %v1080
      %v1137 = vunpack.c.l.b16 %v1081
      %v1138 = vunpack.c.l.b16 %v1082
      %v1139 = vunpack.c.l.b16 %v1083
      %v1140 = vunpack.c.l.b16 %v1084
      %v1141 = vunpack.c.l.b16 %v1085
      %v1142 = vunpack.c.l.b16 %v1086
      %v1143 = vunpack.c.l.b16 %v1087
      %v1144 = vunpack.c.l.b16 %v1088
      %v1145 = vunpack.c.l.b16 %v1089
      %v1146 = vunpack.c.l.b16 %v1090
      %v1147 = vunpack.c.l.b16 %v1091
      %v1148 = vunpack.c.l.b16 %v1092
      %v1149 = vunpack.c.l.b16 %v1093
      %v1150 = vunpack.c.l.b16 %v1094
      %v1151 = vunpack.c.l.b16 %v1095
      %v1152 = vunpack.c.l.b16 %v1096
      %v1153 = vunpack.c.l.b16 %v1097
      %v1154 = vunpack.c.l.b16 %v1098
      %v1155 = vunpack.c.l.b16 %v1099
      %v1156 = vunpack.c.l.b16 %v1100
      %v1157 = vunpack.c.l.b16 %v1101
      %v1158 = vunpack.c.l.b16 %v1102
      %v1159 = vunpack.c.l.b16 %v1103
      %v1160 = vpack.c.b16 %v1133, %v1132
      %v1161 = vpack.c.b16 %v1135, %v1134
      %v1162 = vpack.c.b16 %v1137, %v1136
      %v1163 = vpack.c.b16 %v1139, %v1138
      %v1164 = vpack.c.b16 %v1141, %v1140
      %v1165 = vpack.c.b16 %v1143, %v1142
      %v1166 = vpack.c.b16 %v1145, %v1144
      %v1167 = vpack.c.b16 %v1147, %v1146
      %v1168 = vpack.c.b16 %v1149, %v1148
      %v1169 = vpack.c.b16 %v1151, %v1150
      %v1170 = vpack.c.b16 %v1153, %v1152
      %v1171 = vpack.c.b16 %v1155, %v1154
      %v1172 = vpack.c.b16 %v1157, %v1156
      %v1173 = vpack.c.b16 %v1159, %v1158
      %v1189 = vsel %vm532, %v1069, 0
      %v1192 = vsel %vm532, %v1071, 0
      %v1195 = vsel %vm532, %v1073, 0
      %v1198 = vsel %vm532, %v1075, 0
      %1200 = vmatprep.subr.bf16.mxu0 0
      %1201 = vmatpush1.bf16.msra.mxu0 %v1160
      %1202 = vmatprep.subr.bf16.mxu0 0
      %1203 = vmatpush1.bf16.msra.mxu0 %v1161
      %1204 = vmatprep.subr.bf16.mxu0 0
      %1205 = vmatpush1.bf16.msra.mxu0 %v1162
      %1206 = vmatprep.subr.bf16.mxu0 0
      %1207 = vmatpush1.bf16.msra.mxu0 %v1163
      %1208 = vmatprep.subr.bf16.mxu0 0
      %1209 = vmatpush1.bf16.msra.mxu0 %v1164
      %1210 = vmatprep.subr.bf16.mxu0 0
      %1211 = vmatpush1.bf16.msra.mxu0 %v1165
      %1212 = vmatprep.subr.bf16.mxu0 0
      %1213 = vmatpush1.bf16.msra.mxu0 %v1166
      %1214 = vmatprep.subr.bf16.mxu0 0
      %1215 = vmatpush1.bf16.msra.mxu0 %v1167
      %1216 = vmatprep.subr.bf16.mxu0 0
      %1217 = vmatpush1.bf16.msra.mxu0 %v1168
      %1218 = vmatprep.subr.bf16.mxu0 0
      %1219 = vmatpush1.bf16.msra.mxu0 %v1169
      %1220 = vmatprep.subr.bf16.mxu0 0
      %1221 = vmatpush1.bf16.msra.mxu0 %v1170
      %1222 = vmatprep.subr.bf16.mxu0 0
      %1223 = vmatpush1.bf16.msra.mxu0 %v1171
      %1224 = vmatprep.subr.bf16.mxu0 0
      %1225 = vmatpush1.bf16.msra.mxu0 %v1172
      %1226 = vmatprep.subr.bf16.mxu0 0
      %1227 = vmatpush1.bf16.msra.mxu0 %v1173
      %1228 = vmatprep.subr.bf16.mxu0 0
      %1229 = vmatpush1.bf16.msra.mxu0 0
      %1230 = vmatprep.subr.bf16.mxu0 0
      %1231 = vmatpush1.bf16.msra.mxu0 0
      %1232 = vmatprep.mubr.bf16.mxu0 %v1189
      %1233 = vmatmul.mubr.bf16.gmra.mrb[0].mxu0 %v1068
      %v1234 = vpop.f32.mrb[0].mxu0
      %v1235 = vadd.f32 0.0, %v1234
      %v1236 = vpop.f32.mrb[0].mxu0
      %v1237 = vpop.f32.mrb[0].mxu0
      %v1238 = vadd.f32 0.0, %v1237
      %v1239 = vpop.f32.mrb[0].mxu0
      %1240 = vmatprep.mubr.bf16.mxu0 %v1192
      %1241 = vmatmul.mubr.bf16.gmra.mrb[0].mxu0 %v1070
      %v1242 = vpop.f32.mrb[0].mxu0
      %v1243 = vadd.f32 0.0, %v1242
      %v1244 = vpop.f32.mrb[0].mxu0
      %v1245 = vpop.f32.mrb[0].mxu0
      %v1246 = vadd.f32 0.0, %v1245
      %v1247 = vpop.f32.mrb[0].mxu0
      %1248 = vmatprep.mubr.bf16.mxu0 %v1195
      %1249 = vmatmul.mubr.bf16.gmra.mrb[0].mxu0 %v1072
      %v1250 = vpop.f32.mrb[0].mxu0
      %v1251 = vadd.f32 0.0, %v1250
      %v1252 = vpop.f32.mrb[0].mxu0
      %v1253 = vpop.f32.mrb[0].mxu0
      %v1254 = vadd.f32 0.0, %v1253
      %v1255 = vpop.f32.mrb[0].mxu0
      %1256 = vmatprep.mubr.bf16.mxu0 %v1198
      %1257 = vmatmul.mubr.bf16.gmra.mrb[0].mxu0 %v1074
      %v1258 = vpop.f32.mrb[0].mxu0
      %v1259 = vadd.f32 0.0, %v1258
      %v1260 = vpop.f32.mrb[0].mxu0
      %v1261 = vpop.f32.mrb[0].mxu0
      %v1262 = vadd.f32 0.0, %v1261
      %v1263 = vpop.f32.mrb[0].mxu0
      %1264 = vdwg.mxu0
      %v1265 = vsel %vm514, %v1235, 0.0
      %v1266 = vsel %vm514, %v1238, 0.0
      %v1267 = vadd.f32 %v1265, %v1266
      %v1268 = vsel %vm514, %v1243, 0.0
      %v1269 = vadd.f32 %v1267, %v1268
      %v1270 = vsel %vm514, %v1246, 0.0
      %v1271 = vadd.f32 %v1269, %v1270
      %v1272 = vsel %vm514, %v1251, 0.0
      %v1273 = vadd.f32 %v1271, %v1272
      %v1274 = vsel %vm514, %v1254, 0.0
      %v1275 = vadd.f32 %v1273, %v1274
      %v1276 = vsel %vm514, %v1259, 0.0
      %v1277 = vadd.f32 %v1275, %v1276
      %v1278 = vsel %vm514, %v1262, 0.0
      %v1279 = vadd.f32 %v1277, %v1278
      %v1280 = vrot.slane %v1279, 4
      %v1281 = vadd.f32 %v1279, %v1280
      %v1282 = vrot.slane %v1281, 2
      %v1283 = vadd.f32 %v1281, %v1282
      %v1284 = vrot.slane %v1283, 1
      %v1285 = vadd.f32 %v1283, %v1284
      %v1286 = vrcp.pop 64.0
      %v1287 = vmul.f32 %v1285, %v1286
      %v1288 = vld [vmem:[%s3] sm:$0x3]
      %v1289 = vld [vmem:[%s4] sm:$0x3]
      %v1290 = vmul.f32 %v1287, %v1288
      %vm1291 = vcmask 253952
      %v1292 = vsel %vm1291, %v1290, 0.0
      %1293 = vadd.xlane.f32.xlu0 %v1292
      %v1294 = vpop.xlane.xlu0 %1293
      %v1295 = vmax.f32 %v1294, 0.0
      %v1296 = vmul.f32 %v1295, %v1289
      %v1297 = vadd.f32 %v1296, 0.0
      %vm1298 = vcmask 254977
      %v1299 = vsel %vm1298, %v1290, 0.0
      %1300 = vadd.xlane.f32.xlu0 %v1299
      %v1301 = vpop.xlane.xlu0 %1300
      %v1302 = vmax.f32 %v1301, 0.0
      %v1303 = vmul.f32 %v1302, %v1289
      %v1305 = vrot.slane %v1303, 1
      %v1307 = vadd.f32 %v1297, %v1305
      %v1308 = vxor.u32 %v1307, 2147483648
      %v1309 = vmul.f32 %v1308, 1.442695
      %v1310 = vpow.pop %v1309
      %v1311 = vadd.f32 %v1310, 1.0
      %v1312 = vrcp.pop %v1311
      %v1313 = vmul.f32 1.0, %v1312
      %v1314 = vlaneseq
      %v1315 = vshrl.u32 %v1314, 7
      %v1316 = vsub.s32 0, %v1315
      %v1317 = vrot.slane %v1313, %v1316
      %v1318 = vmul.f32 %v1235, %v1317
      %v1319 = vmul.f32 %v1238, %v1317
      %v1320 = vmul.f32 %v1243, %v1317
      %v1321 = vmul.f32 %v1246, %v1317
      %v1322 = vmul.f32 %v1251, %v1317
      %v1323 = vmul.f32 %v1254, %v1317
      %v1324 = vmul.f32 %v1259, %v1317
      %v1325 = vmul.f32 %v1262, %v1317
      %v1326 = vadd.f32 %v1318, %v234
      %v1327 = vadd.f32 %v1319, %v235
      %v1328 = vadd.f32 %v1320, %v236
      %v1329 = vadd.f32 %v1321, %v237
      %v1330 = vadd.f32 %v1322, %v238
      %v1331 = vadd.f32 %v1323, %v239
      %v1332 = vadd.f32 %v1324, %v240
      %v1333 = vadd.f32 %v1325, %v241
      %v1334 = vmax.f32 %v1326, 0.0
      %v1335 = vmax.f32 %v1327, 0.0
      %v1336 = vmax.f32 %v1328, 0.0
      %v1337 = vmax.f32 %v1329, 0.0
      %v1338 = vmax.f32 %v1330, 0.0
      %v1339 = vmax.f32 %v1331, 0.0
      %v1340 = vmax.f32 %v1332, 0.0
      %v1341 = vmax.f32 %v1333, 0.0
      %1342 = vst.msk [vmem:[%s224] sm:$0xff] %vm514, %v1334
      %1343 = vst.msk [vmem:[%s224 + $0x8] sm:$0xff] %vm514, %v1335
      %1344 = vst.msk [vmem:[%s224 + $0x10] sm:$0xff] %vm514, %v1336
      %1345 = vst.msk [vmem:[%s224 + $0x18] sm:$0xff] %vm514, %v1337
      %1346 = vst.msk [vmem:[%s224 + $0x20] sm:$0xff] %vm514, %v1338
      %1347 = vst.msk [vmem:[%s224 + $0x28] sm:$0xff] %vm514, %v1339
      %1348 = vst.msk [vmem:[%s224 + $0x30] sm:$0xff] %vm514, %v1340
      %1349 = vst.msk [vmem:[%s224 + $0x38] sm:$0xff] %vm514, %v1341
      %p1350 = scmp.lt.s32.totalorder %s16, 1
      %s1351 = scalar_select %p1350, %s16, 1
      %s1352 = smul.addr %s1351, 8
      %s1353 = smul.addr %s1352, 8
      %s1354 = scalar_lea.vmem %s5, %s1353
      // Predicated region
      $region41: #{tpu_custom_call.1} parent=39 // pred_check
        %p1355 = pneg %p144
      $region42: #{tpu_custom_call.1} parent=39 // pred_check_branch
        %1357 = sbr.rel (%p1355) target = $region44
      $region43: #{tpu_custom_call.1} parent=39 // pred_region
        _
      $region44: #{tpu_custom_call.1} parent=39 // pred_fallthru
        _
    $region40: #{tpu_custom_call.1} parent=5 // pred_fallthru
      _
    %p1358 = scmp.le.s32.totalorder 2, %s11
    // Predicated region
    $region45: #{tpu_custom_call.1} parent=5 // pred_check
      %p1359 = pneg %p1358
    $region46: #{tpu_custom_call.1} parent=5 // pred_check_branch
      %1361 = sbr.rel (%p1359) target = $region48
    $region47: #{tpu_custom_call.1} parent=5 // pred_region
      %s1362 = ssub.s32 %s11, 2
      // Predicated region
      $region49: #{tpu_custom_call.1} parent=47 // pred_check
        %p1363 = pneg %p150
      $region50: #{tpu_custom_call.1} parent=47 // pred_check_branch
        %1365 = sbr.rel (%p1363) target = $region52
      $region51: #{tpu_custom_call.1} parent=47 // pred_region
        %p1366 = scmp.lt.s32.totalorder %s17, 1
        %s1367 = scalar_select %p1366, %s17, 1
        %s1368 = smul.addr %s1367, 8
        %s1369 = smul.addr %s1368, 8
        %s1370 = scalar_lea.vmem %s5, %s1369
      $region52: #{tpu_custom_call.1} parent=47 // pred_fallthru
        _
    $region48: #{tpu_custom_call.1} parent=5 // pred_fallthru
      _
  $region6: #{tpu_custom_call.1} parent=0 // loop_footer
    %s15 = sadd.s32 1, %s11
  $region7: #{tpu_custom_call.1} parent=0 // loop_footer_branch
    %10 = sbr.rel target = $region3
  $region8: #{tpu_custom_call.1} parent=0 // loop_exit
    _

</llo_original>
